<compile_context>
chip_gen: v7x
topology: tpu7x:2x2x1
jax: 0.10.0
libtpu: 0.0.40
codegen_flags: <defaults>
</compile_context>

<pallas_src>
import math

import jax
import jax.numpy as jnp
from jax.experimental import pallas as pl
from jax.experimental.pallas import tpu as pltpu


def _round_up(x, m):
    return ((x + m - 1) // m) * m


def _vmem_limit_bytes():
    """64 MiB on 128-MiB parts (v5e/v6e), 48 MiB on 64-MiB parts (v7x)."""
    try:
        cap = pltpu.get_tpu_info().vmem_capacity_bytes
    except Exception:
        cap = 64 * 1024 * 1024  # conservative: valid on every generation
    if cap >= 100 * 1024 * 1024:
        return 64 * 1024 * 1024
    return 48 * 1024 * 1024


# ---------------- Kernel 1: support = X @ W (bf16 in, f32 acc, bf16 out) ----


def _support_kernel(x_ref, w_ref, s_ref):
    s_ref[...] = jnp.dot(
        x_ref[...], w_ref[...], preferred_element_type=jnp.float32
    ).astype(s_ref.dtype)


# ---------------- Kernel 2: output = A @ S + b ------------------------------


def _aggregate_resident_s_kernel(a_ref, s_ref, b_ref, o_ref):
    # S is fully VMEM-resident (fetched from HBM exactly once); the f32 output
    # block is resident across the reduction axis, so init with bias at k==0
    # and accumulate straight into it.
    k = pl.program_id(1)
    tk = a_ref.shape[1]

    @pl.when(k == 0)
    def _():
        o_ref[...] = jnp.broadcast_to(b_ref[...], o_ref.shape)

    start = pl.multiple_of(k * tk, 128)
    s_tile = s_ref[pl.ds(start, tk), :]
    o_ref[...] += jnp.dot(a_ref[...], s_tile, preferred_element_type=jnp.float32)


def _aggregate_tiled_s_kernel(a_ref, s_ref, b_ref, o_ref):
    # Fallback when S does not fit VMEM: S streamed one k-tile at a time.
    k = pl.program_id(1)

    @pl.when(k == 0)
    def _():
        o_ref[...] = jnp.broadcast_to(b_ref[...], o_ref.shape)

    o_ref[...] += jnp.dot(a_ref[...], s_ref[...], preferred_element_type=jnp.float32)


# ---------------- Wrapper ----------------------------------------------------


def graph_convolution(adjacency, input_feature, weight, bias=None, *, tm=512, tk=512):
    """GCN layer: (A @ (X @ W)) + b, as two Pallas TPU kernels."""
    N, D = input_feature.shape
    assert weight.shape[0] == D
    F = weight.shape[1]
    f32 = jnp.float32
    bf16 = jnp.bfloat16
    vmem_limit = _vmem_limit_bytes()

    # Lane-dense output feature dim (multiple of 128) -> unmasked vst.
    f_pad = _round_up(F, 128)

    # Row tile: multiple of 16 (bf16 sublane packing); reduction tile: 128.
    tm = max(16, (min(tm, _round_up(N, 16)) // 16) * 16)
    # v7x megacore: keep >= 2 row tiles so the "parallel" axis load-balances
    # across both TensorCores.
    if _round_up(N, tm) // tm < 2 and tm >= 32:
        tm = max(16, _round_up(tm // 2, 16))
    tk = max(128, (min(tk, _round_up(N, 128)) // 128) * 128)

    n_rows = _round_up(N, tm)   # rows of A / rows of output
    n_cols = _round_up(N, tk)   # cols of A / rows of support

    # ---- Wrapper-side prep: cast to bf16 FIRST, then pad (single pass). ----
    adj_b = adjacency.astype(bf16)
    if (n_rows, n_cols) != (N, N):
        adj_b = jnp.pad(adj_b, ((0, n_rows - N), (0, n_cols - N)))

    x_b = input_feature.astype(bf16)
    if n_cols != N:
        x_b = jnp.pad(x_b, ((0, n_cols - N), (0, 0)))

    w_b = weight.astype(bf16)
    if f_pad != F:
        w_b = jnp.pad(w_b, ((0, 0), (0, f_pad - F)))

    b_p = jnp.zeros((1, f_pad), f32)
    if bias is not None:
        b_p = b_p.at[0, :F].set(bias.astype(f32))

    # ---- Kernel 1: support = X @ W (hoisted out of the aggregation loop). --
    support = pl.pallas_call(
        _support_kernel,
        out_shape=jax.ShapeDtypeStruct((n_cols, f_pad), bf16),
        grid_spec=pltpu.PrefetchScalarGridSpec(
            num_scalar_prefetch=0,
            grid=(n_cols // tk,),
            in_specs=[
                pl.BlockSpec((tk, D), lambda i: (i, 0)),      # X row tile (bf16)
                pl.BlockSpec((D, f_pad), lambda i: (0, 0)),   # full W (bf16)
            ],
            out_specs=pl.BlockSpec((tk, f_pad), lambda i: (i, 0)),
        ),
        compiler_params=pltpu.CompilerParams(
            dimension_semantics=("parallel",),
            vmem_limit_bytes=vmem_limit),
        cost_estimate=pl.CostEstimate(
            flops=2 * n_cols * D * f_pad,
            transcendentals=0,
            bytes_accessed=2 * n_cols * D + 2 * D * f_pad + 2 * n_cols * f_pad),
    )(x_b, w_b)

    # ---- Kernel 2: output = A @ support + b. -------------------------------
    # Keep S fully VMEM-resident when it fits (double-buffer headroom ~1/3 of
    # the VMEM budget), so it is streamed from HBM exactly once.
    resident_s = (2 * n_cols * f_pad * 2) <= (vmem_limit // 3)

    if resident_s:
        agg_kernel = _aggregate_resident_s_kernel
        s_spec = pl.BlockSpec((n_cols, f_pad), lambda i, k: (0, 0))
        s_bytes = 2 * n_cols * f_pad                       # fetched once
    else:
        agg_kernel = _aggregate_tiled_s_kernel
        s_spec = pl.BlockSpec((tk, f_pad), lambda i, k: (k, 0))
        s_bytes = 2 * n_cols * f_pad * (n_rows // tm)      # re-read per row tile

    out_p = pl.pallas_call(
        agg_kernel,
        out_shape=jax.ShapeDtypeStruct((n_rows, f_pad), f32),
        grid_spec=pltpu.PrefetchScalarGridSpec(
            num_scalar_prefetch=0,
            grid=(n_rows // tm, n_cols // tk),              # reduction axis last
            in_specs=[
                pl.BlockSpec((tm, tk), lambda i, k: (i, k)),    # A tile (bf16)
                s_spec,                                         # support (bf16)
                pl.BlockSpec((1, f_pad), lambda i, k: (0, 0)),  # bias (f32)
            ],
            out_specs=pl.BlockSpec((tm, f_pad), lambda i, k: (i, 0)),
        ),
        compiler_params=pltpu.CompilerParams(
            dimension_semantics=("parallel", "arbitrary"),
            vmem_limit_bytes=vmem_limit),
        cost_estimate=pl.CostEstimate(
            flops=2 * n_rows * n_cols * f_pad,
            transcendentals=0,
            bytes_accessed=(2 * n_rows * n_cols + s_bytes
                            + 4 * f_pad + 4 * n_rows * f_pad)),
    )(adj_b, support, b_p)

    return out_p[:N, :F]


def init_params(key, input_dim, output_dim, use_bias=True):
    # Mirrors init.kaiming_uniform_(weight): bound = sqrt(6 / fan_in),
    # where torch's fan_in for an (input_dim, output_dim) tensor is output_dim.
    bound = math.sqrt(6.0 / output_dim)
    weight = jax.random.uniform(key, (input_dim, output_dim),
                                minval=-bound, maxval=bound, dtype=jnp.float32)
    bias = jnp.zeros((output_dim,), dtype=jnp.float32) if use_bias else None
    return weight, bias


if __name__ == "__main__":
    # Small synthetic problem: N=384 nodes, input_dim=64, output_dim=32.
    # The tm-halving logic gives 2 row tiles (192 each), exercising the
    # resident-S accumulate path and the megacore "parallel" row axis.
    N, D, F = 384, 64, 32
    key = jax.random.PRNGKey(0)
    k_adj, k_x, k_w = jax.random.split(key, 3)

    # Deterministic "sparse-ish" adjacency: random binary + self-loops, row-normalized.
    adj_bin = (jax.random.uniform(k_adj, (N, N)) < 0.05).astype(jnp.float32)
    adj = adj_bin + jnp.eye(N, dtype=jnp.float32)
    adj = adj / jnp.sum(adj, axis=1, keepdims=True)

    x = jax.random.normal(k_x, (N, D), dtype=jnp.float32)
    weight, bias = init_params(k_w, D, F, use_bias=True)

    out = graph_convolution(adj, x, weight, bias)
    out = jax.block_until_ready(out)

    # Reference in plain f32 JAX (kernel streams A/X/W/S as bf16, accumulates f32,
    # hence the loose tolerance).
    ref = adj @ (x @ weight) + bias[None, :]
    assert out.shape == (N, F)
    assert jnp.allclose(out, ref, atol=2e-2, rtol=2e-2), "mismatch vs reference"

    print("KERNEL_OK")
</pallas_src>

<mosaic_0001>
module attributes {stable_mosaic.version = 11 : i64} {
  func.func @_support_kernel(%arg0: i32, %arg1: memref<384x64xbf16, #tpu.memory_space<vmem>>, %arg2: memref<64x128xbf16, #tpu.memory_space<vmem>>, %arg3: memref<384x128xbf16, #tpu.memory_space<vmem>>) attributes {dimension_semantics = [#tpu.dimension_semantics<parallel>], iteration_bounds = array<i64: 1>, scalar_prefetch = 0 : i64, scratch_operands = 0 : i64, tpu.core_type = #tpu.core_type<tc>, window_params = [{transform_indices = @transform_0, window_bounds = array<i64: 384, 64>}, {pipeline_mode = #tpu.pipeline_mode<synchronous>, transform_indices = @transform_1, window_bounds = array<i64: 64, 128>}, {transform_indices = @transform_2, window_bounds = array<i64: 384, 128>}]} {
    %c0 = arith.constant 0 : index
    %c0_0 = arith.constant 0 : index
    %0 = vector.load %arg1[%c0, %c0_0] : memref<384x64xbf16, #tpu.memory_space<vmem>>, vector<384x64xbf16>
    %c0_1 = arith.constant 0 : index
    %c0_2 = arith.constant 0 : index
    %1 = vector.load %arg2[%c0_1, %c0_2] : memref<64x128xbf16, #tpu.memory_space<vmem>>, vector<64x128xbf16>
    %cst = arith.constant dense<0.000000e+00> : vector<384x128xf32>
    %2 = tpu.matmul %0, %1, %cst {dimension_numbers = #tpu.dot_dimension_numbers<[1], [0], [0], [1], [0, 0, 1, 1], [], []>} : vector<384x64xbf16>, vector<64x128xbf16>, vector<384x128xf32> -> vector<384x128xf32>
    %3 = arith.truncf %2 : vector<384x128xf32> to vector<384x128xbf16>
    %c0_3 = arith.constant 0 : index
    %c0_4 = arith.constant 0 : index
    %4 = vector.load %arg3[%c0_3, %c0_4] : memref<384x128xbf16, #tpu.memory_space<vmem>>, vector<384x128xbf16>
    tpu.vector_store %arg3[%c0_3, %c0_4], %3 {strides = array<i32>} : memref<384x128xbf16, #tpu.memory_space<vmem>>, vector<384x128xbf16>,
    return
  }
  func.func @transform_0(%arg0: i32) -> (i32, i32) {
    %c0_i32 = arith.constant 0 : i32
    %c0_i32_0 = arith.constant 0 : i32
    return %arg0, %c0_i32 : i32, i32
  }
  func.func @transform_1(%arg0: i32) -> (i32, i32) {
    %c0_i32 = arith.constant 0 : i32
    %c0_i32_0 = arith.constant 0 : i32
    %c0_i32_1 = arith.constant 0 : i32
    return %c0_i32, %c0_i32_0 : i32, i32
  }
  func.func @transform_2(%arg0: i32) -> (i32, i32) {
    %c0_i32 = arith.constant 0 : i32
    %c0_i32_0 = arith.constant 0 : i32
    return %arg0, %c0_i32 : i32, i32
  }
}

</mosaic_0001>

<llo_original>
// kernel: tpu_custom_call.1
$region0: #{tpu_custom_call.1}
  #allocation0 [shape = 'u32[]', space=smem, size = 0x4, offset = 0x4, fixed_abs, tag = 'smem constant byte address 0x4 - core index']
  #allocation1 [shape = 'u32[144,128]{1,0:T(1,128)}', space=vmem, size = 0x12000, scoped, tag = 'internal scratch']
  %s0 = inlined_call_operand.vmem [shape: bf16[384,64], index: 0, kind: input, shape index: {}]
  %s1 = inlined_call_operand.vmem [shape: bf16[64,128], index: 1, kind: input, shape index: {}]
  %s2 = inlined_call_operand.hbm [shape: bf16[384,128], index: 2, kind: output, shape index: {}]
  %s3 = sld [smem:[#allocation0]]
  $region18: #{tpu_custom_call.1} parent=0
    _
  %s5 = ssub.s32 1, %s3
  %s6 = scalar_select 0, %s5, %s3
  $region1: #{tpu_custom_call.1} parent=0
    #allocation2 [shape = 'u8[98304]{0}', space=vmem, size = 0x18000, scoped, tag = 'output window, operand 0, single buffered']
    #allocation3 [shape = 's32[1]{0}', space=sflag, size = 0x4, scoped, tag = 'scoped memory for tpu_custom_call.1']
    %7 = vsyncpa [#allocation3], 0
    // Predicated region
    $region2: #{tpu_custom_call.1} parent=1 // pred_check
      _
    $region3: #{tpu_custom_call.1} parent=1 // pred_check_branch
      %9 = sbr.rel (0) target = $region5
    $region4: #{tpu_custom_call.1} parent=1 // pred_region
      _
    $region5: #{tpu_custom_call.1} parent=1 // pred_fallthru
      _
    // Predicated region
    $region6: #{tpu_custom_call.1} parent=1 // pred_check
      _
    $region7: #{tpu_custom_call.1} parent=1 // pred_check_branch
      %11 = sbr.rel (0) target = $region9
    $region8: #{tpu_custom_call.1} parent=1 // pred_region
      _
    $region9: #{tpu_custom_call.1} parent=1 // pred_fallthru
      _
    %v13 = vld [vmem:[%s0] sm:$0xf]
    %v14 = vld [vmem:[%s0 + $0x4] sm:$0xf]
    %v15 = vld [vmem:[%s0 + $0x8] sm:$0xf]
    %v16 = vld [vmem:[%s0 + $0xc] sm:$0xf]
    %v17 = vld [vmem:[%s0 + $0x10] sm:$0xf]
    %v18 = vld [vmem:[%s0 + $0x14] sm:$0xf]
    %v19 = vld [vmem:[%s0 + $0x18] sm:$0xf]
    %v20 = vld [vmem:[%s0 + $0x1c] sm:$0xf]
    %v21 = vld [vmem:[%s0 + $0x20] sm:$0xf]
    %v22 = vld [vmem:[%s0 + $0x24] sm:$0xf]
    %v23 = vld [vmem:[%s0 + $0x28] sm:$0xf]
    %v24 = vld [vmem:[%s0 + $0x2c] sm:$0xf]
    %v25 = vld [vmem:[%s0 + $0x30] sm:$0xf]
    %v26 = vld [vmem:[%s0 + $0x34] sm:$0xf]
    %v27 = vld [vmem:[%s0 + $0x38] sm:$0xf]
    %v28 = vld [vmem:[%s0 + $0x3c] sm:$0xf]
    %v29 = vld [vmem:[%s0 + $0x40] sm:$0xf]
    %v30 = vld [vmem:[%s0 + $0x44] sm:$0xf]
    %v31 = vld [vmem:[%s0 + $0x48] sm:$0xf]
    %v32 = vld [vmem:[%s0 + $0x4c] sm:$0xf]
    %v33 = vld [vmem:[%s0 + $0x50] sm:$0xf]
    %v34 = vld [vmem:[%s0 + $0x54] sm:$0xf]
    %v35 = vld [vmem:[%s0 + $0x58] sm:$0xf]
    %v36 = vld [vmem:[%s0 + $0x5c] sm:$0xf]
    %v37 = vld [vmem:[%s0 + $0x60] sm:$0xf]
    %v38 = vld [vmem:[%s0 + $0x64] sm:$0xf]
    %v39 = vld [vmem:[%s0 + $0x68] sm:$0xf]
    %v40 = vld [vmem:[%s0 + $0x6c] sm:$0xf]
    %v41 = vld [vmem:[%s0 + $0x70] sm:$0xf]
    %v42 = vld [vmem:[%s0 + $0x74] sm:$0xf]
    %v43 = vld [vmem:[%s0 + $0x78] sm:$0xf]
    %v44 = vld [vmem:[%s0 + $0x7c] sm:$0xf]
    %v45 = vld [vmem:[%s0 + $0x80] sm:$0xf]
    %v46 = vld [vmem:[%s0 + $0x84] sm:$0xf]
    %v47 = vld [vmem:[%s0 + $0x88] sm:$0xf]
    %v48 = vld [vmem:[%s0 + $0x8c] sm:$0xf]
    %v49 = vld [vmem:[%s0 + $0x90] sm:$0xf]
    %v50 = vld [vmem:[%s0 + $0x94] sm:$0xf]
    %v51 = vld [vmem:[%s0 + $0x98] sm:$0xf]
    %v52 = vld [vmem:[%s0 + $0x9c] sm:$0xf]
    %v53 = vld [vmem:[%s0 + $0xa0] sm:$0xf]
    %v54 = vld [vmem:[%s0 + $0xa4] sm:$0xf]
    %v55 = vld [vmem:[%s0 + $0xa8] sm:$0xf]
    %v56 = vld [vmem:[%s0 + $0xac] sm:$0xf]
    %v57 = vld [vmem:[%s0 + $0xb0] sm:$0xf]
    %v58 = vld [vmem:[%s0 + $0xb4] sm:$0xf]
    %v59 = vld [vmem:[%s0 + $0xb8] sm:$0xf]
    %v60 = vld [vmem:[%s0 + $0xbc] sm:$0xf]
    %v61 = vld [vmem:[%s1] sm:$0xf]
    %v62 = vld [vmem:[%s1 + $0x4] sm:$0xf]
    %v63 = vld [vmem:[%s1 + $0x8] sm:$0xf]
    %v64 = vld [vmem:[%s1 + $0xc] sm:$0xf]
    %v65 = vld [vmem:[%s1 + $0x10] sm:$0xf]
    %v66 = vld [vmem:[%s1 + $0x14] sm:$0xf]
    %v67 = vld [vmem:[%s1 + $0x18] sm:$0xf]
    %v68 = vld [vmem:[%s1 + $0x1c] sm:$0xf]
    %v117 = vunpack.c.l.b16 %v13
    %v118 = vunpack.c.l.b16 %v14
    %v119 = vunpack.c.l.b16 %v15
    %v120 = vunpack.c.l.b16 %v16
    %v121 = vunpack.c.l.b16 %v17
    %v122 = vunpack.c.l.b16 %v18
    %v123 = vunpack.c.l.b16 %v19
    %v124 = vunpack.c.l.b16 %v20
    %v125 = vunpack.c.l.b16 %v21
    %v126 = vunpack.c.l.b16 %v22
    %v127 = vunpack.c.l.b16 %v23
    %v128 = vunpack.c.l.b16 %v24
    %v129 = vunpack.c.l.b16 %v25
    %v130 = vunpack.c.l.b16 %v26
    %v131 = vunpack.c.l.b16 %v27
    %v132 = vunpack.c.l.b16 %v28
    %v133 = vunpack.c.l.b16 %v29
    %v134 = vunpack.c.l.b16 %v30
    %v135 = vunpack.c.l.b16 %v31
    %v136 = vunpack.c.l.b16 %v32
    %v137 = vunpack.c.l.b16 %v33
    %v138 = vunpack.c.l.b16 %v34
    %v139 = vunpack.c.l.b16 %v35
    %v140 = vunpack.c.l.b16 %v36
    %v141 = vunpack.c.l.b16 %v37
    %v142 = vunpack.c.l.b16 %v38
    %v143 = vunpack.c.l.b16 %v39
    %v144 = vunpack.c.l.b16 %v40
    %v145 = vunpack.c.l.b16 %v41
    %v146 = vunpack.c.l.b16 %v42
    %v147 = vunpack.c.l.b16 %v43
    %v148 = vunpack.c.l.b16 %v44
    %v149 = vunpack.c.l.b16 %v45
    %v150 = vunpack.c.l.b16 %v46
    %v151 = vunpack.c.l.b16 %v47
    %v152 = vunpack.c.l.b16 %v48
    %v153 = vunpack.c.l.b16 %v49
    %v154 = vunpack.c.l.b16 %v50
    %v155 = vunpack.c.l.b16 %v51
    %v156 = vunpack.c.l.b16 %v52
    %v157 = vunpack.c.l.b16 %v53
    %v158 = vunpack.c.l.b16 %v54
    %v159 = vunpack.c.l.b16 %v55
    %v160 = vunpack.c.l.b16 %v56
    %v161 = vunpack.c.l.b16 %v57
    %v162 = vunpack.c.l.b16 %v58
    %v163 = vunpack.c.l.b16 %v59
    %v164 = vunpack.c.l.b16 %v60
    %v165 = vpack.c.b16 %v118, %v117
    %v166 = vpack.c.b16 %v120, %v119
    %v167 = vpack.c.b16 %v122, %v121
    %v168 = vpack.c.b16 %v124, %v123
    %v169 = vpack.c.b16 %v126, %v125
    %v170 = vpack.c.b16 %v128, %v127
    %v171 = vpack.c.b16 %v130, %v129
    %v172 = vpack.c.b16 %v132, %v131
    %v173 = vpack.c.b16 %v134, %v133
    %v174 = vpack.c.b16 %v136, %v135
    %v175 = vpack.c.b16 %v138, %v137
    %v176 = vpack.c.b16 %v140, %v139
    %v177 = vpack.c.b16 %v142, %v141
    %v178 = vpack.c.b16 %v144, %v143
    %v179 = vpack.c.b16 %v146, %v145
    %v180 = vpack.c.b16 %v148, %v147
    %v181 = vpack.c.b16 %v150, %v149
    %v182 = vpack.c.b16 %v152, %v151
    %v183 = vpack.c.b16 %v154, %v153
    %v184 = vpack.c.b16 %v156, %v155
    %v185 = vpack.c.b16 %v158, %v157
    %v186 = vpack.c.b16 %v160, %v159
    %v187 = vpack.c.b16 %v162, %v161
    %v188 = vpack.c.b16 %v164, %v163
    %v197 = vunpack.c.l.b16 %v61
    %v198 = vunpack.c.l.b16 %v62
    %v199 = vunpack.c.l.b16 %v63
    %v200 = vunpack.c.l.b16 %v64
    %v201 = vunpack.c.l.b16 %v65
    %v202 = vunpack.c.l.b16 %v66
    %v203 = vunpack.c.l.b16 %v67
    %v204 = vunpack.c.l.b16 %v68
    %v205 = vpack.c.b16 %v198, %v197
    %v206 = vpack.c.b16 %v200, %v199
    %v207 = vpack.c.b16 %v202, %v201
    %v208 = vpack.c.b16 %v204, %v203
    %vm213 = vcmask 523264
    %v215 = vsel %vm213, %v165, 0
    %v218 = vsel %vm213, %v166, 0
    %v221 = vsel %vm213, %v167, 0
    %v224 = vsel %vm213, %v168, 0
    %v227 = vsel %vm213, %v169, 0
    %v230 = vsel %vm213, %v170, 0
    %v233 = vsel %vm213, %v171, 0
    %v236 = vsel %vm213, %v172, 0
    %v239 = vsel %vm213, %v173, 0
    %v242 = vsel %vm213, %v174, 0
    %v245 = vsel %vm213, %v175, 0
    %v248 = vsel %vm213, %v176, 0
    %v251 = vsel %vm213, %v177, 0
    %v254 = vsel %vm213, %v178, 0
    %v257 = vsel %vm213, %v179, 0
    %v260 = vsel %vm213, %v180, 0
    %v263 = vsel %vm213, %v181, 0
    %v266 = vsel %vm213, %v182, 0
    %v269 = vsel %vm213, %v183, 0
    %v272 = vsel %vm213, %v184, 0
    %v275 = vsel %vm213, %v185, 0
    %v278 = vsel %vm213, %v186, 0
    %v281 = vsel %vm213, %v187, 0
    %v284 = vsel %vm213, %v188, 0
    %286 = vmatprep.subr.bf16.mxu0 0
    %287 = vmatpush1.bf16.msra.mxu0 %v205
    %288 = vmatprep.subr.bf16.mxu0 0
    %289 = vmatpush1.bf16.msra.mxu0 %v206
    %290 = vmatprep.subr.bf16.mxu0 0
    %291 = vmatpush1.bf16.msra.mxu0 %v207
    %292 = vmatprep.subr.bf16.mxu0 0
    %293 = vmatpush1.bf16.msra.mxu0 %v208
    %294 = vmatprep.subr.bf16.mxu0 0
    %295 = vmatpush1.bf16.msra.mxu0 0
    %296 = vmatprep.subr.bf16.mxu0 0
    %297 = vmatpush1.bf16.msra.mxu0 0
    %298 = vmatprep.subr.bf16.mxu0 0
    %299 = vmatpush1.bf16.msra.mxu0 0
    %300 = vmatprep.subr.bf16.mxu0 0
    %301 = vmatpush1.bf16.msra.mxu0 0
    %302 = vmatprep.subr.bf16.mxu0 0
    %303 = vmatpush1.bf16.msra.mxu0 0
    %304 = vmatprep.subr.bf16.mxu0 0
    %305 = vmatpush1.bf16.msra.mxu0 0
    %306 = vmatprep.subr.bf16.mxu0 0
    %307 = vmatpush1.bf16.msra.mxu0 0
    %308 = vmatprep.subr.bf16.mxu0 0
    %309 = vmatpush1.bf16.msra.mxu0 0
    %310 = vmatprep.subr.bf16.mxu0 0
    %311 = vmatpush1.bf16.msra.mxu0 0
    %312 = vmatprep.subr.bf16.mxu0 0
    %313 = vmatpush1.bf16.msra.mxu0 0
    %314 = vmatprep.subr.bf16.mxu0 0
    %315 = vmatpush1.bf16.msra.mxu0 0
    %316 = vmatprep.subr.bf16.mxu0 0
    %317 = vmatpush1.bf16.msra.mxu0 0
    %318 = vmatprep.mubr.bf16.mxu0 0
    %319 = vmatmul.mubr.bf16.gmra.mrb[0].mxu0 %v215
    %v320 = vpop.f32.mrb[0].mxu0
    %v321 = vadd.f32 0.0, %v320
    %v322 = vpop.f32.mrb[0].mxu0
    %v323 = vpop.f32.mrb[0].mxu0
    %v324 = vadd.f32 0.0, %v323
    %v325 = vpop.f32.mrb[0].mxu0
    %326 = vmatprep.mubr.bf16.mxu0 0
    %327 = vmatmul.mubr.bf16.gmra.mrb[0].mxu0 %v218
    %v328 = vpop.f32.mrb[0].mxu0
    %v329 = vadd.f32 0.0, %v328
    %v330 = vpop.f32.mrb[0].mxu0
    %v331 = vpop.f32.mrb[0].mxu0
    %v332 = vadd.f32 0.0, %v331
    %v333 = vpop.f32.mrb[0].mxu0
    %334 = vmatprep.mubr.bf16.mxu0 0
    %335 = vmatmul.mubr.bf16.gmra.mrb[0].mxu0 %v221
    %v336 = vpop.f32.mrb[0].mxu0
    %v337 = vadd.f32 0.0, %v336
    %v338 = vpop.f32.mrb[0].mxu0
    %v339 = vpop.f32.mrb[0].mxu0
    %v340 = vadd.f32 0.0, %v339
    %v341 = vpop.f32.mrb[0].mxu0
    %342 = vmatprep.mubr.bf16.mxu0 0
    %343 = vmatmul.mubr.bf16.gmra.mrb[0].mxu0 %v224
    %v344 = vpop.f32.mrb[0].mxu0
    %v345 = vadd.f32 0.0, %v344
    %v346 = vpop.f32.mrb[0].mxu0
    %v347 = vpop.f32.mrb[0].mxu0
    %v348 = vadd.f32 0.0, %v347
    %v349 = vpop.f32.mrb[0].mxu0
    %350 = vmatprep.mubr.bf16.mxu0 0
    %351 = vmatmul.mubr.bf16.gmra.mrb[0].mxu0 %v227
    %v352 = vpop.f32.mrb[0].mxu0
    %v353 = vadd.f32 0.0, %v352
    %v354 = vpop.f32.mrb[0].mxu0
    %v355 = vpop.f32.mrb[0].mxu0
    %v356 = vadd.f32 0.0, %v355
    %v357 = vpop.f32.mrb[0].mxu0
    %358 = vmatprep.mubr.bf16.mxu0 0
    %359 = vmatmul.mubr.bf16.gmra.mrb[0].mxu0 %v230
    %v360 = vpop.f32.mrb[0].mxu0
    %v361 = vadd.f32 0.0, %v360
    %v362 = vpop.f32.mrb[0].mxu0
    %v363 = vpop.f32.mrb[0].mxu0
    %v364 = vadd.f32 0.0, %v363
    %v365 = vpop.f32.mrb[0].mxu0
    %366 = vmatprep.mubr.bf16.mxu0 0
    %367 = vmatmul.mubr.bf16.gmra.mrb[0].mxu0 %v233
    %v368 = vpop.f32.mrb[0].mxu0
    %v369 = vadd.f32 0.0, %v368
    %v370 = vpop.f32.mrb[0].mxu0
    %v371 = vpop.f32.mrb[0].mxu0
    %v372 = vadd.f32 0.0, %v371
    %v373 = vpop.f32.mrb[0].mxu0
    %374 = vmatprep.mubr.bf16.mxu0 0
    %375 = vmatmul.mubr.bf16.gmra.mrb[0].mxu0 %v236
    %v376 = vpop.f32.mrb[0].mxu0
    %v377 = vadd.f32 0.0, %v376
    %v378 = vpop.f32.mrb[0].mxu0
    %v379 = vpop.f32.mrb[0].mxu0
    %v380 = vadd.f32 0.0, %v379
    %v381 = vpop.f32.mrb[0].mxu0
    %382 = vmatprep.mubr.bf16.mxu0 0
    %383 = vmatmul.mubr.bf16.gmra.mrb[0].mxu0 %v239
    %v384 = vpop.f32.mrb[0].mxu0
    %v385 = vadd.f32 0.0, %v384
    %v386 = vpop.f32.mrb[0].mxu0
    %v387 = vpop.f32.mrb[0].mxu0
    %v388 = vadd.f32 0.0, %v387
    %v389 = vpop.f32.mrb[0].mxu0
    %390 = vmatprep.mubr.bf16.mxu0 0
    %391 = vmatmul.mubr.bf16.gmra.mrb[0].mxu0 %v242
    %v392 = vpop.f32.mrb[0].mxu0
    %v393 = vadd.f32 0.0, %v392
    %v394 = vpop.f32.mrb[0].mxu0
    %v395 = vpop.f32.mrb[0].mxu0
    %v396 = vadd.f32 0.0, %v395
    %v397 = vpop.f32.mrb[0].mxu0
    %398 = vmatprep.mubr.bf16.mxu0 0
    %399 = vmatmul.mubr.bf16.gmra.mrb[0].mxu0 %v245
    %v400 = vpop.f32.mrb[0].mxu0
    %v401 = vadd.f32 0.0, %v400
    %v402 = vpop.f32.mrb[0].mxu0
    %v403 = vpop.f32.mrb[0].mxu0
    %v404 = vadd.f32 0.0, %v403
    %v405 = vpop.f32.mrb[0].mxu0
    %406 = vmatprep.mubr.bf16.mxu0 0
    %407 = vmatmul.mubr.bf16.gmra.mrb[0].mxu0 %v248
    %v408 = vpop.f32.mrb[0].mxu0
    %v409 = vadd.f32 0.0, %v408
    %v410 = vpop.f32.mrb[0].mxu0
    %v411 = vpop.f32.mrb[0].mxu0
    %v412 = vadd.f32 0.0, %v411
    %v413 = vpop.f32.mrb[0].mxu0
    %414 = vmatprep.mubr.bf16.mxu0 0
    %415 = vmatmul.mubr.bf16.gmra.mrb[0].mxu0 %v251
    %v416 = vpop.f32.mrb[0].mxu0
    %v417 = vadd.f32 0.0, %v416
    %v418 = vpop.f32.mrb[0].mxu0
    %v419 = vpop.f32.mrb[0].mxu0
    %v420 = vadd.f32 0.0, %v419
    %v421 = vpop.f32.mrb[0].mxu0
    %422 = vmatprep.mubr.bf16.mxu0 0
    %423 = vmatmul.mubr.bf16.gmra.mrb[0].mxu0 %v254
    %v424 = vpop.f32.mrb[0].mxu0
    %v425 = vadd.f32 0.0, %v424
    %v426 = vpop.f32.mrb[0].mxu0
    %v427 = vpop.f32.mrb[0].mxu0
    %v428 = vadd.f32 0.0, %v427
    %v429 = vpop.f32.mrb[0].mxu0
    %430 = vmatprep.mubr.bf16.mxu0 0
    %431 = vmatmul.mubr.bf16.gmra.mrb[0].mxu0 %v257
    %v432 = vpop.f32.mrb[0].mxu0
    %v433 = vadd.f32 0.0, %v432
    %v434 = vpop.f32.mrb[0].mxu0
    %v435 = vpop.f32.mrb[0].mxu0
    %v436 = vadd.f32 0.0, %v435
    %v437 = vpop.f32.mrb[0].mxu0
    %438 = vmatprep.mubr.bf16.mxu0 0
    %439 = vmatmul.mubr.bf16.gmra.mrb[0].mxu0 %v260
    %v440 = vpop.f32.mrb[0].mxu0
    %v441 = vadd.f32 0.0, %v440
    %v442 = vpop.f32.mrb[0].mxu0
    %v443 = vpop.f32.mrb[0].mxu0
    %v444 = vadd.f32 0.0, %v443
    %v445 = vpop.f32.mrb[0].mxu0
    %446 = vmatprep.mubr.bf16.mxu0 0
    %447 = vmatmul.mubr.bf16.gmra.mrb[0].mxu0 %v263
    %v448 = vpop.f32.mrb[0].mxu0
    %v449 = vadd.f32 0.0, %v448
    %v450 = vpop.f32.mrb[0].mxu0
    %v451 = vpop.f32.mrb[0].mxu0
    %v452 = vadd.f32 0.0, %v451
    %v453 = vpop.f32.mrb[0].mxu0
    %454 = vmatprep.mubr.bf16.mxu0 0
    %455 = vmatmul.mubr.bf16.gmra.mrb[0].mxu0 %v266
    %v456 = vpop.f32.mrb[0].mxu0
    %v457 = vadd.f32 0.0, %v456
    %v458 = vpop.f32.mrb[0].mxu0
    %v459 = vpop.f32.mrb[0].mxu0
    %v460 = vadd.f32 0.0, %v459
    %v461 = vpop.f32.mrb[0].mxu0
    %462 = vmatprep.mubr.bf16.mxu0 0
    %463 = vmatmul.mubr.bf16.gmra.mrb[0].mxu0 %v269
    %v464 = vpop.f32.mrb[0].mxu0
    %v465 = vadd.f32 0.0, %v464
    %v466 = vpop.f32.mrb[0].mxu0
    %v467 = vpop.f32.mrb[0].mxu0
    %v468 = vadd.f32 0.0, %v467
    %v469 = vpop.f32.mrb[0].mxu0
    %470 = vmatprep.mubr.bf16.mxu0 0
    %471 = vmatmul.mubr.bf16.gmra.mrb[0].mxu0 %v272
    %v472 = vpop.f32.mrb[0].mxu0
    %v473 = vadd.f32 0.0, %v472
    %v474 = vpop.f32.mrb[0].mxu0
    %v475 = vpop.f32.mrb[0].mxu0
    %v476 = vadd.f32 0.0, %v475
    %v477 = vpop.f32.mrb[0].mxu0
    %478 = vmatprep.mubr.bf16.mxu0 0
    %479 = vmatmul.mubr.bf16.gmra.mrb[0].mxu0 %v275
    %v480 = vpop.f32.mrb[0].mxu0
    %v481 = vadd.f32 0.0, %v480
    %v482 = vpop.f32.mrb[0].mxu0
    %v483 = vpop.f32.mrb[0].mxu0
    %v484 = vadd.f32 0.0, %v483
    %v485 = vpop.f32.mrb[0].mxu0
    %486 = vmatprep.mubr.bf16.mxu0 0
    %487 = vmatmul.mubr.bf16.gmra.mrb[0].mxu0 %v278
    %v488 = vpop.f32.mrb[0].mxu0
    %v489 = vadd.f32 0.0, %v488
    %v490 = vpop.f32.mrb[0].mxu0
    %v491 = vpop.f32.mrb[0].mxu0
    %v492 = vadd.f32 0.0, %v491
    %v493 = vpop.f32.mrb[0].mxu0
    %494 = vmatprep.mubr.bf16.mxu0 0
    %495 = vmatmul.mubr.bf16.gmra.mrb[0].mxu0 %v281
    %v496 = vpop.f32.mrb[0].mxu0
    %v497 = vadd.f32 0.0, %v496
    %v498 = vpop.f32.mrb[0].mxu0
    %v499 = vpop.f32.mrb[0].mxu0
    %v500 = vadd.f32 0.0, %v499
    %v501 = vpop.f32.mrb[0].mxu0
    %502 = vmatprep.mubr.bf16.mxu0 0
    %503 = vmatmul.mubr.bf16.gmra.mrb[0].mxu0 %v284
    %v504 = vpop.f32.mrb[0].mxu0
    %v505 = vadd.f32 0.0, %v504
    %v506 = vpop.f32.mrb[0].mxu0
    %v507 = vpop.f32.mrb[0].mxu0
    %v508 = vadd.f32 0.0, %v507
    %v509 = vpop.f32.mrb[0].mxu0
    %510 = vdwg.mxu0
    %v511 = vpack.c.bf16 %v324, %v321
    %v512 = vpack.c.bf16 %v332, %v329
    %v513 = vpack.c.bf16 %v340, %v337
    %v514 = vpack.c.bf16 %v348, %v345
    %v515 = vpack.c.bf16 %v356, %v353
    %v516 = vpack.c.bf16 %v364, %v361
    %v517 = vpack.c.bf16 %v372, %v369
    %v518 = vpack.c.bf16 %v380, %v377
    %v519 = vpack.c.bf16 %v388, %v385
    %v520 = vpack.c.bf16 %v396, %v393
    %v521 = vpack.c.bf16 %v404, %v401
    %v522 = vpack.c.bf16 %v412, %v409
    %v523 = vpack.c.bf16 %v420, %v417
    %v524 = vpack.c.bf16 %v428, %v425
    %v525 = vpack.c.bf16 %v436, %v433
    %v526 = vpack.c.bf16 %v444, %v441
    %v527 = vpack.c.bf16 %v452, %v449
    %v528 = vpack.c.bf16 %v460, %v457
    %v529 = vpack.c.bf16 %v468, %v465
    %v530 = vpack.c.bf16 %v476, %v473
    %v531 = vpack.c.bf16 %v484, %v481
    %v532 = vpack.c.bf16 %v492, %v489
    %v533 = vpack.c.bf16 %v500, %v497
    %v534 = vpack.c.bf16 %v508, %v505
    %v559 = vunpack.c.l.b16 %v511
    %v560 = vunpack.c.h.b16 %v511
    %v561 = vunpack.c.l.b16 %v512
    %v562 = vunpack.c.h.b16 %v512
    %v563 = vunpack.c.l.b16 %v513
    %v564 = vunpack.c.h.b16 %v513
    %v565 = vunpack.c.l.b16 %v514
    %v566 = vunpack.c.h.b16 %v514
    %v567 = vunpack.c.l.b16 %v515
    %v568 = vunpack.c.h.b16 %v515
    %v569 = vunpack.c.l.b16 %v516
    %v570 = vunpack.c.h.b16 %v516
    %v571 = vunpack.c.l.b16 %v517
    %v572 = vunpack.c.h.b16 %v517
    %v573 = vunpack.c.l.b16 %v518
    %v574 = vunpack.c.h.b16 %v518
    %v575 = vunpack.c.l.b16 %v519
    %v576 = vunpack.c.h.b16 %v519
    %v577 = vunpack.c.l.b16 %v520
    %v578 = vunpack.c.h.b16 %v520
    %v579 = vunpack.c.l.b16 %v521
    %v580 = vunpack.c.h.b16 %v521
    %v581 = vunpack.c.l.b16 %v522
    %v582 = vunpack.c.h.b16 %v522
    %v583 = vunpack.c.l.b16 %v523
    %v584 = vunpack.c.h.b16 %v523
    %v585 = vunpack.c.l.b16 %v524
    %v586 = vunpack.c.h.b16 %v524
    %v587 = vunpack.c.l.b16 %v525
    %v588 = vunpack.c.h.b16 %v525
    %v589 = vunpack.c.l.b16 %v526
    %v590 = vunpack.c.h.b16 %v526
    %v591 = vunpack.c.l.b16 %v527
    %v592 = vunpack.c.h.b16 %v527
    %v593 = vunpack.c.l.b16 %v528
    %v594 = vunpack.c.h.b16 %v528
    %v595 = vunpack.c.l.b16 %v529
    %v596 = vunpack.c.h.b16 %v529
    %v597 = vunpack.c.l.b16 %v530
    %v598 = vunpack.c.h.b16 %v530
    %v599 = vunpack.c.l.b16 %v531
    %v600 = vunpack.c.h.b16 %v531
    %v601 = vunpack.c.l.b16 %v532
    %v602 = vunpack.c.h.b16 %v532
    %v603 = vunpack.c.l.b16 %v533
    %v604 = vunpack.c.h.b16 %v533
    %v605 = vunpack.c.l.b16 %v534
    %v606 = vunpack.c.h.b16 %v534
    %v607 = vpack.c.b16 %v559, %v559
    %v608 = vpack.c.b16 %v560, %v560
    %v609 = vpack.c.b16 %v561, %v561
    %v610 = vpack.c.b16 %v562, %v562
    %v611 = vpack.c.b16 %v563, %v563
    %v612 = vpack.c.b16 %v564, %v564
    %v613 = vpack.c.b16 %v565, %v565
    %v614 = vpack.c.b16 %v566, %v566
    %v615 = vpack.c.b16 %v567, %v567
    %v616 = vpack.c.b16 %v568, %v568
    %v617 = vpack.c.b16 %v569, %v569
    %v618 = vpack.c.b16 %v570, %v570
    %v619 = vpack.c.b16 %v571, %v571
    %v620 = vpack.c.b16 %v572, %v572
    %v621 = vpack.c.b16 %v573, %v573
    %v622 = vpack.c.b16 %v574, %v574
    %v623 = vpack.c.b16 %v575, %v575
    %v624 = vpack.c.b16 %v576, %v576
    %v625 = vpack.c.b16 %v577, %v577
    %v626 = vpack.c.b16 %v578, %v578
    %v627 = vpack.c.b16 %v579, %v579
    %v628 = vpack.c.b16 %v580, %v580
    %v629 = vpack.c.b16 %v581, %v581
    %v630 = vpack.c.b16 %v582, %v582
    %v631 = vpack.c.b16 %v583, %v583
    %v632 = vpack.c.b16 %v584, %v584
    %v633 = vpack.c.b16 %v585, %v585
    %v634 = vpack.c.b16 %v586, %v586
    %v635 = vpack.c.b16 %v587, %v587
    %v636 = vpack.c.b16 %v588, %v588
    %v637 = vpack.c.b16 %v589, %v589
    %v638 = vpack.c.b16 %v590, %v590
    %v639 = vpack.c.b16 %v591, %v591
    %v640 = vpack.c.b16 %v592, %v592
    %v641 = vpack.c.b16 %v593, %v593
    %v642 = vpack.c.b16 %v594, %v594
    %v643 = vpack.c.b16 %v595, %v595
    %v644 = vpack.c.b16 %v596, %v596
    %v645 = vpack.c.b16 %v597, %v597
    %v646 = vpack.c.b16 %v598, %v598
    %v647 = vpack.c.b16 %v599, %v599
    %v648 = vpack.c.b16 %v600, %v600
    %v649 = vpack.c.b16 %v601, %v601
    %v650 = vpack.c.b16 %v602, %v602
    %v651 = vpack.c.b16 %v603, %v603
    %v652 = vpack.c.b16 %v604, %v604
    %v653 = vpack.c.b16 %v605, %v605
    %v654 = vpack.c.b16 %v606, %v606
    %703 = vst [vmem:[#allocation2] sm:$0xf] %v607
    %704 = vst [vmem:[#allocation2 + $0x4] sm:$0xf] %v608
    %705 = vst [vmem:[#allocation2 + $0x8] sm:$0xf] %v609
    %706 = vst [vmem:[#allocation2 + $0xc] sm:$0xf] %v610
    %707 = vst [vmem:[#allocation2 + $0x10] sm:$0xf] %v611
    %708 = vst [vmem:[#allocation2 + $0x14] sm:$0xf] %v612
    %709 = vst [vmem:[#allocation2 + $0x18] sm:$0xf] %v613
    %710 = vst [vmem:[#allocation2 + $0x1c] sm:$0xf] %v614
    %711 = vst [vmem:[#allocation2 + $0x20] sm:$0xf] %v615
    %712 = vst [vmem:[#allocation2 + $0x24] sm:$0xf] %v616
    %713 = vst [vmem:[#allocation2 + $0x28] sm:$0xf] %v617
    %714 = vst [vmem:[#allocation2 + $0x2c] sm:$0xf] %v618
    %715 = vst [vmem:[#allocation2 + $0x30] sm:$0xf] %v619
    %716 = vst [vmem:[#allocation2 + $0x34] sm:$0xf] %v620
    %717 = vst [vmem:[#allocation2 + $0x38] sm:$0xf] %v621
    %718 = vst [vmem:[#allocation2 + $0x3c] sm:$0xf] %v622
    %719 = vst [vmem:[#allocation2 + $0x40] sm:$0xf] %v623
    %720 = vst [vmem:[#allocation2 + $0x44] sm:$0xf] %v624
    %721 = vst [vmem:[#allocation2 + $0x48] sm:$0xf] %v625
    %722 = vst [vmem:[#allocation2 + $0x4c] sm:$0xf] %v626
    %723 = vst [vmem:[#allocation2 + $0x50] sm:$0xf] %v627
    %724 = vst [vmem:[#allocation2 + $0x54] sm:$0xf] %v628
    %725 = vst [vmem:[#allocation2 + $0x58] sm:$0xf] %v629
    %726 = vst [vmem:[#allocation2 + $0x5c] sm:$0xf] %v630
    %727 = vst [vmem:[#allocation2 + $0x60] sm:$0xf] %v631
    %728 = vst [vmem:[#allocation2 + $0x64] sm:$0xf] %v632
    %729 = vst [vmem:[#allocation2 + $0x68] sm:$0xf] %v633
    %730 = vst [vmem:[#allocation2 + $0x6c] sm:$0xf] %v634
    %731 = vst [vmem:[#allocation2 + $0x70] sm:$0xf] %v635
    %732 = vst [vmem:[#allocation2 + $0x74] sm:$0xf] %v636
    %733 = vst [vmem:[#allocation2 + $0x78] sm:$0xf] %v637
    %734 = vst [vmem:[#allocation2 + $0x7c] sm:$0xf] %v638
    %735 = vst [vmem:[#allocation2 + $0x80] sm:$0xf] %v639
    %736 = vst [vmem:[#allocation2 + $0x84] sm:$0xf] %v640
    %737 = vst [vmem:[#allocation2 + $0x88] sm:$0xf] %v641
    %738 = vst [vmem:[#allocation2 + $0x8c] sm:$0xf] %v642
    %739 = vst [vmem:[#allocation2 + $0x90] sm:$0xf] %v643
    %740 = vst [vmem:[#allocation2 + $0x94] sm:$0xf] %v644
    %741 = vst [vmem:[#allocation2 + $0x98] sm:$0xf] %v645
    %742 = vst [vmem:[#allocation2 + $0x9c] sm:$0xf] %v646
    %743 = vst [vmem:[#allocation2 + $0xa0] sm:$0xf] %v647
    %744 = vst [vmem:[#allocation2 + $0xa4] sm:$0xf] %v648
    %745 = vst [vmem:[#allocation2 + $0xa8] sm:$0xf] %v649
    %746 = vst [vmem:[#allocation2 + $0xac] sm:$0xf] %v650
    %747 = vst [vmem:[#allocation2 + $0xb0] sm:$0xf] %v651
    %748 = vst [vmem:[#allocation2 + $0xb4] sm:$0xf] %v652
    %749 = vst [vmem:[#allocation2 + $0xb8] sm:$0xf] %v653
    %750 = vst [vmem:[#allocation2 + $0xbc] sm:$0xf] %v654
    // Predicated region
    $region10: #{tpu_custom_call.1} parent=1 // pred_check
      _
    $region11: #{tpu_custom_call.1} parent=1 // pred_check_branch
      %752 = sbr.rel (0) target = $region13
    $region12: #{tpu_custom_call.1} parent=1 // pred_region
      %s754 = ssub.s32 3072, 3072
      %755 = vsyncadd [#allocation3], %s754
      %s756 = sshll.u32 [#allocation2], 4
      %s757 = int_to_ptr.vmem [resolvable:$true] %s756
      %762 = dma.vmem_to_hbm [thread:$0]  %s757, 3072, %s2, [#allocation3], 64, 64, 4
    $region13: #{tpu_custom_call.1} parent=1 // pred_fallthru
      _
    // Predicated region
    $region14: #{tpu_custom_call.1} parent=1 // pred_check
      _
    $region15: #{tpu_custom_call.1} parent=1 // pred_check_branch
      %764 = sbr.rel (0) target = $region17
    $region16: #{tpu_custom_call.1} parent=1 // pred_region
      %765 = dma.done [#allocation3], 3072
    $region17: #{tpu_custom_call.1} parent=1 // pred_fallthru
      _
    %766 = vsyncpa [#allocation3], 1

</llo_original>
